<compile_context>
chip_gen: v7x
topology: tpu7x:2x2x1
jax: 0.10.0
libtpu: 0.0.40
codegen_flags: <defaults>
</compile_context>

<pallas_src>
import functools
import math

import jax
import jax.numpy as jnp
from jax.experimental import pallas as pl
from jax.experimental.pallas import tpu as pltpu


# --------------------------------------------------------------------------
# Generation-dependent defaults
# --------------------------------------------------------------------------

def _hw_config():
    vmem_bytes = None
    try:
        get_info = getattr(pltpu, "get_tpu_info", None)
        if get_info is not None:
            info = get_info()
            vmem_bytes = getattr(info, "vmem_capacity_bytes", None)
    except Exception:
        vmem_bytes = None
    if vmem_bytes is None:
        vmem_bytes = 64 * 1024 * 1024          # unknown -> be conservative
    if vmem_bytes <= 64 * 1024 * 1024:          # v7x-class (64 MiB physical)
        return dict(vmem_limit=48 * 1024 * 1024,
                    tm_mm=128, tn_mm=256, tk_mm=512,
                    tm_ffn=128, ti_ffn=1024, tm_ln=512)
    # v5e / v6e class (128 MiB physical VMEM)
    return dict(vmem_limit=100 * 1024 * 1024,
                tm_mm=512, tn_mm=256, tk_mm=512,
                tm_ffn=512, ti_ffn=2048, tm_ln=1024)


_HW = _hw_config()


def _pick_tile(dim, pref, align):
    """Largest divisor of `dim` that is <= pref and a multiple of `align`;
    falls back to the full dimension (block == full dim is always legal)."""
    if dim <= pref:
        return dim
    t = (pref // align) * align
    while t >= align:
        if dim % t == 0:
            return t
        t -= align
    return dim


# --------------------------------------------------------------------------
# Plain tiled matmul + bias (qkv projection, classifier head)
# --------------------------------------------------------------------------

def _linear_kernel(x_ref, w_ref, b_ref, o_ref, acc_ref):
    k = pl.program_id(2)

    @pl.when(k == 0)
    def _init():
        acc_ref[...] = jnp.zeros_like(acc_ref)

    acc_ref[...] += jnp.dot(x_ref[...], w_ref[...],
                            preferred_element_type=jnp.float32)

    @pl.when(k == pl.num_programs(2) - 1)
    def _finalize():
        o_ref[...] = (acc_ref[...] + b_ref[...].astype(jnp.float32)
                      ).astype(o_ref.dtype)


def linear(x, w, b, out_dtype=None, tm=None, tn=None, tk=None):
    """x: [M, K], w: [K, N], b: [N] -> [M, N]."""
    M, K = x.shape
    N = w.shape[1]
    out_dtype = out_dtype or x.dtype
    tm = _pick_tile(M, tm or _HW["tm_mm"], 8)
    tn = _pick_tile(N, tn or _HW["tn_mm"], 128)
    tk = _pick_tile(K, tk or _HW["tk_mm"], 128)
    grid = (M // tm, N // tn, K // tk)
    return pl.pallas_call(
        _linear_kernel,
        out_shape=jax.ShapeDtypeStruct((M, N), out_dtype),
        grid_spec=pltpu.PrefetchScalarGridSpec(
            num_scalar_prefetch=0,
            grid=grid,
            in_specs=[
                pl.BlockSpec((tm, tk), lambda i, j, k: (i, k)),
                pl.BlockSpec((tk, tn), lambda i, j, k: (k, j)),
                pl.BlockSpec((1, tn), lambda i, j, k: (0, j)),
            ],
            out_specs=pl.BlockSpec((tm, tn), lambda i, j, k: (i, j)),
            scratch_shapes=[pltpu.VMEM((tm, tn), jnp.float32)],
        ),
        compiler_params=pltpu.CompilerParams(
            dimension_semantics=("parallel", "parallel", "arbitrary"),
            vmem_limit_bytes=_HW["vmem_limit"]),
    )(x, w, b.reshape(1, N))


# --------------------------------------------------------------------------
# Matmul + bias + residual-add + LayerNorm (attention output projection)
# Output tile covers the full row (tn = N) so LN can run in the epilogue.
# --------------------------------------------------------------------------

def _linear_add_ln_kernel(x_ref, w_ref, b_ref, r_ref, g_ref, bt_ref,
                          o_ref, acc_ref, *, eps):
    k = pl.program_id(1)

    @pl.when(k == 0)
    def _init():
        acc_ref[...] = jnp.zeros_like(acc_ref)

    acc_ref[...] += jnp.dot(x_ref[...], w_ref[...],
                            preferred_element_type=jnp.float32)

    @pl.when(k == pl.num_programs(1) - 1)
    def _finalize():
        y = (acc_ref[...] + b_ref[...].astype(jnp.float32)
             + r_ref[...].astype(jnp.float32))
        mu = jnp.mean(y, axis=-1, keepdims=True)
        var = jnp.mean(jnp.square(y - mu), axis=-1, keepdims=True)
        y = (y - mu) * jax.lax.rsqrt(var + eps)
        o_ref[...] = (y * g_ref[...].astype(jnp.float32)
                      + bt_ref[...].astype(jnp.float32)).astype(o_ref.dtype)


def linear_add_ln(x, w, b, res, gamma, beta, eps=1e-5, out_dtype=None,
                  tm=None, tk=None):
    """LayerNorm(res + x @ w + b).  x: [M, K], w: [K, N], res: [M, N]."""
    M, K = x.shape
    N = w.shape[1]
    out_dtype = out_dtype or x.dtype
    tm = _pick_tile(M, tm or _HW["tm_mm"], 8)
    tk = _pick_tile(K, tk or _HW["tk_mm"], 128)
    grid = (M // tm, K // tk)
    return pl.pallas_call(
        functools.partial(_linear_add_ln_kernel, eps=eps),
        out_shape=jax.ShapeDtypeStruct((M, N), out_dtype),
        grid_spec=pltpu.PrefetchScalarGridSpec(
            num_scalar_prefetch=0,
            grid=grid,
            in_specs=[
                pl.BlockSpec((tm, tk), lambda i, k: (i, k)),
                pl.BlockSpec((tk, N), lambda i, k: (k, 0)),
                pl.BlockSpec((1, N), lambda i, k: (0, 0)),
                pl.BlockSpec((tm, N), lambda i, k: (i, 0)),   # residual
                pl.BlockSpec((1, N), lambda i, k: (0, 0)),    # gamma
                pl.BlockSpec((1, N), lambda i, k: (0, 0)),    # beta
            ],
            out_specs=pl.BlockSpec((tm, N), lambda i, k: (i, 0)),
            scratch_shapes=[pltpu.VMEM((tm, N), jnp.float32)],
        ),
        compiler_params=pltpu.CompilerParams(
            dimension_semantics=("parallel", "arbitrary"),
            vmem_limit_bytes=_HW["vmem_limit"]),
    )(x, w, b.reshape(1, N), res, gamma.reshape(1, N), beta.reshape(1, N))


# --------------------------------------------------------------------------
# FFN with I-chunk streaming + fused residual-add + LayerNorm epilogue:
#   out = LN(x + GELU(x @ w1 + b1) @ w2 + b2)
# --------------------------------------------------------------------------

def _ffn_add_ln_kernel(x_ref, w1_ref, b1_ref, w2_ref, b2_ref, g_ref, bt_ref,
                       o_ref, acc_ref, *, eps):
    j = pl.program_id(1)

    @pl.when(j == 0)
    def _init():
        acc_ref[...] = jnp.zeros_like(acc_ref)

    h = jnp.dot(x_ref[...], w1_ref[...], preferred_element_type=jnp.float32)
    # TODO(synk): HF RoBERTa uses exact erf-GELU; tanh approximation here.
    h = jax.nn.gelu(h + b1_ref[...].astype(jnp.float32), approximate=True)
    acc_ref[...] += jnp.dot(h.astype(x_ref.dtype), w2_ref[...],
                            preferred_element_type=jnp.float32)

    @pl.when(j == pl.num_programs(1) - 1)
    def _finalize():
        y = (acc_ref[...] + b2_ref[...].astype(jnp.float32)
             + x_ref[...].astype(jnp.float32))
        mu = jnp.mean(y, axis=-1, keepdims=True)
        var = jnp.mean(jnp.square(y - mu), axis=-1, keepdims=True)
        y = (y - mu) * jax.lax.rsqrt(var + eps)
        o_ref[...] = (y * g_ref[...].astype(jnp.float32)
                      + bt_ref[...].astype(jnp.float32)).astype(o_ref.dtype)


def ffn_add_ln(x, w1, b1, w2, b2, gamma, beta, eps=1e-5, tm=None, ti=None):
    M, H = x.shape
    I = w1.shape[1]
    tm = _pick_tile(M, tm or _HW["tm_ffn"], 8)
    ti = _pick_tile(I, ti or _HW["ti_ffn"], 128)
    grid = (M // tm, I // ti)
    return pl.pallas_call(
        functools.partial(_ffn_add_ln_kernel, eps=eps),
        out_shape=jax.ShapeDtypeStruct((M, H), x.dtype),
        grid_spec=pltpu.PrefetchScalarGridSpec(
            num_scalar_prefetch=0,
            grid=grid,
            in_specs=[
                pl.BlockSpec((tm, H), lambda i, j: (i, 0)),   # x (LHS + residual)
                pl.BlockSpec((H, ti), lambda i, j: (0, j)),   # w1 chunk
                pl.BlockSpec((1, ti), lambda i, j: (0, j)),   # b1 chunk
                pl.BlockSpec((ti, H), lambda i, j: (j, 0)),   # w2 chunk
                pl.BlockSpec((1, H), lambda i, j: (0, 0)),    # b2
                pl.BlockSpec((1, H), lambda i, j: (0, 0)),    # gamma
                pl.BlockSpec((1, H), lambda i, j: (0, 0)),    # beta
            ],
            out_specs=pl.BlockSpec((tm, H), lambda i, j: (i, 0)),
            scratch_shapes=[pltpu.VMEM((tm, H), jnp.float32)],
        ),
        compiler_params=pltpu.CompilerParams(
            dimension_semantics=("parallel", "arbitrary"),
            vmem_limit_bytes=_HW["vmem_limit"]),
    )(x, w1, b1.reshape(1, I), w2, b2.reshape(1, H),
      gamma.reshape(1, H), beta.reshape(1, H))


# --------------------------------------------------------------------------
# Standalone residual-add + LayerNorm (embeddings only)
# --------------------------------------------------------------------------

def _add_ln_kernel(x_ref, r_ref, g_ref, b_ref, o_ref, *, eps):
    x = x_ref[...].astype(jnp.float32) + r_ref[...].astype(jnp.float32)
    mu = jnp.mean(x, axis=-1, keepdims=True)
    var = jnp.mean(jnp.square(x - mu), axis=-1, keepdims=True)
    y = (x - mu) * jax.lax.rsqrt(var + eps)
    o_ref[...] = (y * g_ref[...].astype(jnp.float32)
                  + b_ref[...].astype(jnp.float32)).astype(o_ref.dtype)


def add_layernorm(x, res, gamma, beta, eps=1e-5, out_dtype=None, tm=None):
    M, H = x.shape
    out_dtype = out_dtype or x.dtype
    tm = _pick_tile(M, tm or _HW["tm_ln"], 8)
    return pl.pallas_call(
        functools.partial(_add_ln_kernel, eps=eps),
        out_shape=jax.ShapeDtypeStruct((M, H), out_dtype),
        grid_spec=pltpu.PrefetchScalarGridSpec(
            num_scalar_prefetch=0,
            grid=(M // tm,),
            in_specs=[
                pl.BlockSpec((tm, H), lambda i: (i, 0)),
                pl.BlockSpec((tm, H), lambda i: (i, 0)),
                pl.BlockSpec((1, H), lambda i: (0, 0)),
                pl.BlockSpec((1, H), lambda i: (0, 0)),
            ],
            out_specs=pl.BlockSpec((tm, H), lambda i: (i, 0)),
        ),
        compiler_params=pltpu.CompilerParams(
            dimension_semantics=("parallel",),
            vmem_limit_bytes=_HW["vmem_limit"]),
    )(x, res, gamma.reshape(1, H), beta.reshape(1, H))


# --------------------------------------------------------------------------
# Attention: one grid step per batch; reads Q/K/V per head straight from the
# fused [B*S, 3H] qkv activation (no XLA transposes / column slices) and
# writes context into a lane-dense [B*S, H] buffer.
# --------------------------------------------------------------------------
# TODO(synk): for long sequences, switch to a flash-style KV-tiled online
# softmax so per-step VMEM is independent of S.

def _attn_kernel(qkv_ref, m_ref, o_ref, *, nH, Dh, H, scale):
    m = m_ref[...].astype(jnp.float32)                  # (1, S) additive mask
    qkv = qkv_ref[...]                                  # (S, 3H) bf16
    for h in range(nH):                                 # static unroll
        q = qkv[:, h * Dh:(h + 1) * Dh]                 # (S, Dh)
        k = qkv[:, H + h * Dh:H + (h + 1) * Dh]
        v = qkv[:, 2 * H + h * Dh:2 * H + (h + 1) * Dh]
        s = jax.lax.dot_general(q, k, (((1,), (1,)), ((), ())),
                                preferred_element_type=jnp.float32)
        s = s * scale + m
        s = s - jnp.max(s, axis=-1, keepdims=True)
        p = jnp.exp(s)
        p = p * pl.reciprocal(jnp.sum(p, axis=-1, keepdims=True), approx=True)
        ctx = jnp.dot(p.astype(qkv.dtype), v,
                      preferred_element_type=jnp.float32)
        o_ref[:, h * Dh:(h + 1) * Dh] = ctx.astype(o_ref.dtype)


def attention(qkv, add_mask, B, S, nH, Dh):
    """qkv: [B*S, 3H] (fused); add_mask: [B, 1, S] additive (0 / -1e9)."""
    H = nH * Dh
    scale = 1.0 / math.sqrt(Dh)
    return pl.pallas_call(
        functools.partial(_attn_kernel, nH=nH, Dh=Dh, H=H, scale=scale),
        out_shape=jax.ShapeDtypeStruct((B * S, H), qkv.dtype),
        grid_spec=pltpu.PrefetchScalarGridSpec(
            num_scalar_prefetch=0,
            grid=(B,),
            in_specs=[
                pl.BlockSpec((S, 3 * H), lambda b: (b, 0)),
                pl.BlockSpec((None, 1, S), lambda b: (b, 0, 0)),
            ],
            out_specs=pl.BlockSpec((S, H), lambda b: (b, 0)),
        ),
        compiler_params=pltpu.CompilerParams(
            dimension_semantics=("parallel",),
            vmem_limit_bytes=_HW["vmem_limit"]),
    )(qkv, add_mask)


# --------------------------------------------------------------------------
# Model definition (synthetic small RoBERTa + per-annotator classifiers)
# --------------------------------------------------------------------------

def init_params(key, cfg):
    H, I, C, A = (cfg["hidden"], cfg["intermediate"],
                  cfg["num_classes"], cfg["num_annots"])
    keys = iter(jax.random.split(key, 256))

    def w(shape, scale=0.02):
        return jax.random.normal(next(keys), shape, jnp.float32) * scale

    params = dict(
        word_emb=w((cfg["vocab"], H)),
        pos_emb=w((cfg["max_pos"], H)),
        type_emb=w((cfg["type_vocab"], H)),
        emb_ln_g=jnp.ones((H,), jnp.float32),
        emb_ln_b=jnp.zeros((H,), jnp.float32),
        layers=[],
    )
    for _ in range(cfg["layers"]):
        wqkv = jnp.concatenate([w((H, H)), w((H, H)), w((H, H))], axis=1)
        params["layers"].append(dict(
            wqkv=wqkv.astype(jnp.bfloat16),
            bqkv=jnp.zeros((3 * H,), jnp.float32),
            wo=w((H, H)).astype(jnp.bfloat16), bo=jnp.zeros((H,), jnp.float32),
            ln1_g=jnp.ones((H,), jnp.float32), ln1_b=jnp.zeros((H,), jnp.float32),
            w1=w((H, I)).astype(jnp.bfloat16), b1=jnp.zeros((I,), jnp.float32),
            w2=w((I, H)).astype(jnp.bfloat16), b2=jnp.zeros((H,), jnp.float32),
            ln2_g=jnp.ones((H,), jnp.float32), ln2_b=jnp.zeros((H,), jnp.float32),
        ))

    # All per-annotator classifiers collapsed into one lane-dense matmul
    # (output columns padded up to a multiple of 128 -> unmasked stores).
    n_cls = A * C
    n_pad = ((n_cls + 127) // 128) * 128
    w_cat = jnp.concatenate([w((H, C)) for _ in range(A)], axis=1)
    w_cat = jnp.pad(w_cat, ((0, 0), (0, n_pad - n_cls)))
    params["cls_w"] = w_cat.astype(jnp.bfloat16)
    params["cls_b"] = jnp.zeros((n_pad,), jnp.float32)
    return params


def multitask_roberta_forward(params, input_ids, attention_mask, cfg):
    B, S = input_ids.shape
    H = cfg["hidden"]
    nH = cfg["heads"]
    Dh = H // nH
    C = cfg["num_classes"]

    # --- embeddings (gathers + cumsum are glue) ---
    mask_i = attention_mask.astype(jnp.int32)
    position_ids = jnp.cumsum(mask_i, axis=1) * mask_i + cfg["pad_idx"]
    word = params["word_emb"][input_ids]                       # [B, S, H] f32
    pos = params["pos_emb"][position_ids]
    tok = params["type_emb"][jnp.zeros_like(input_ids)]
    x = add_layernorm((word + pos).astype(jnp.bfloat16).reshape(B * S, H),
                      tok.astype(jnp.bfloat16).reshape(B * S, H),
                      params["emb_ln_g"], params["emb_ln_b"],
                      out_dtype=jnp.bfloat16)                  # [B*S, H] bf16

    # additive attention mask: 0 where attended, -1e9 where padded
    add_mask = (1.0 - attention_mask.astype(jnp.float32))[:, None, :] * -1e9

    # --- transformer layers (post-LN, RoBERTa style) ---
    for layer in params["layers"]:
        qkv = linear(x, layer["wqkv"], layer["bqkv"])          # [B*S, 3H] bf16
        ctx = attention(qkv, add_mask, B, S, nH, Dh)           # [B*S, H]  bf16
        x = linear_add_ln(ctx, layer["wo"], layer["bo"], x,    # LN(x + ctx@Wo)
                          layer["ln1_g"], layer["ln1_b"])
        x = ffn_add_ln(x, layer["w1"], layer["b1"],            # LN(x + FFN(x))
                       layer["w2"], layer["b2"],
                       layer["ln2_g"], layer["ln2_b"])

    # --- [CLS] token through all per-annotator classifiers at once ---
    cls = x.reshape(B, S, H)[:, 0, :]                          # [B, H] bf16
    logits = linear(cls, params["cls_w"], params["cls_b"],
                    out_dtype=jnp.float32)                     # [B, n_pad] f32
    return [logits[:, a * C:(a + 1) * C] for a in range(cfg["num_annots"])]


# --------------------------------------------------------------------------

if __name__ == "__main__":
    cfg = dict(
        vocab=100, hidden=32, heads=4, intermediate=64, layers=2,
        max_pos=64, type_vocab=1, pad_idx=1, num_annots=3, num_classes=4,
    )
    B, S = 2, 8

    root = jax.random.PRNGKey(0)
    k_params, k_ids = jax.random.split(root)
    params = init_params(k_params, cfg)

    input_ids = jax.random.randint(k_ids, (B, S), 2, cfg["vocab"], dtype=jnp.int32)
    attention_mask = jnp.array([[1, 1, 1, 1, 1, 1, 1, 1],
                                [1, 1, 1, 1, 1, 1, 0, 0]], dtype=jnp.int32)

    outputs = multitask_roberta_forward(params, input_ids, attention_mask, cfg)
    outputs = [jax.block_until_ready(o) for o in outputs]

    assert len(outputs) == cfg["num_annots"]
    for o in outputs:
        assert o.shape == (B, cfg["num_classes"])
        assert o.dtype == jnp.float32
        assert bool(jnp.all(jnp.isfinite(o)))

    print("KERNEL_OK")
</pallas_src>

<mosaic_0001>
module attributes {stable_mosaic.version = 11 : i64} {
  func.func @_add_ln_kernel(%arg0: i32, %arg1: memref<16x32xbf16, #tpu.memory_space<vmem>>, %arg2: memref<16x32xbf16, #tpu.memory_space<vmem>>, %arg3: memref<1x32xf32, #tpu.memory_space<vmem>>, %arg4: memref<1x32xf32, #tpu.memory_space<vmem>>, %arg5: memref<16x32xbf16, #tpu.memory_space<vmem>>) attributes {dimension_semantics = [#tpu.dimension_semantics<parallel>], iteration_bounds = array<i64: 1>, scalar_prefetch = 0 : i64, scratch_operands = 0 : i64, tpu.core_type = #tpu.core_type<tc>, window_params = [{transform_indices = @transform_0, window_bounds = array<i64: 16, 32>}, {transform_indices = @transform_1, window_bounds = array<i64: 16, 32>}, {pipeline_mode = #tpu.pipeline_mode<synchronous>, transform_indices = @transform_2, window_bounds = array<i64: 1, 32>}, {pipeline_mode = #tpu.pipeline_mode<synchronous>, transform_indices = @transform_3, window_bounds = array<i64: 1, 32>}, {transform_indices = @transform_4, window_bounds = array<i64: 16, 32>}]} {
    %c0 = arith.constant 0 : index
    %c0_0 = arith.constant 0 : index
    %0 = vector.load %arg1[%c0, %c0_0] : memref<16x32xbf16, #tpu.memory_space<vmem>>, vector<16x32xbf16>
    %1 = arith.extf %0 : vector<16x32xbf16> to vector<16x32xf32>
    %c0_1 = arith.constant 0 : index
    %c0_2 = arith.constant 0 : index
    %2 = vector.load %arg2[%c0_1, %c0_2] : memref<16x32xbf16, #tpu.memory_space<vmem>>, vector<16x32xbf16>
    %3 = arith.extf %2 : vector<16x32xbf16> to vector<16x32xf32>
    %4 = arith.addf %1, %3 : vector<16x32xf32>
    %cst = arith.constant dense<0.000000e+00> : vector<16xf32>
    %5 = vector.multi_reduction <add>, %4, %cst [1] : vector<16x32xf32> to vector<16xf32>
    %6 = vector.shape_cast %5 : vector<16xf32> to vector<16x1xf32>
    %cst_3 = arith.constant 3.200000e+01 : f32
    %7 = vector.broadcast %cst_3 : f32 to vector<16x1xf32>
    %8 = arith.divf %6, %7 : vector<16x1xf32>
    %9 = vector.broadcast %8 : vector<16x1xf32> to vector<16x32xf32>
    %10 = arith.subf %4, %9 : vector<16x32xf32>
    %11 = arith.mulf %10, %10 : vector<16x32xf32>
    %cst_4 = arith.constant dense<0.000000e+00> : vector<16xf32>
    %12 = vector.multi_reduction <add>, %11, %cst_4 [1] : vector<16x32xf32> to vector<16xf32>
    %13 = vector.shape_cast %12 : vector<16xf32> to vector<16x1xf32>
    %cst_5 = arith.constant 3.200000e+01 : f32
    %14 = vector.broadcast %cst_5 : f32 to vector<16x1xf32>
    %15 = arith.divf %13, %14 : vector<16x1xf32>
    %16 = vector.broadcast %8 : vector<16x1xf32> to vector<16x32xf32>
    %17 = arith.subf %4, %16 : vector<16x32xf32>
    %cst_6 = arith.constant 9.99999974E-6 : f32
    %18 = vector.broadcast %cst_6 : f32 to vector<16x1xf32>
    %19 = arith.addf %15, %18 : vector<16x1xf32>
    %20 = math.rsqrt %19 : vector<16x1xf32>
    %21 = vector.broadcast %20 : vector<16x1xf32> to vector<16x32xf32>
    %22 = arith.mulf %17, %21 : vector<16x32xf32>
    %c0_7 = arith.constant 0 : index
    %c0_8 = arith.constant 0 : index
    %23 = vector.load %arg3[%c0_7, %c0_8] : memref<1x32xf32, #tpu.memory_space<vmem>>, vector<1x32xf32>
    %24 = vector.broadcast %23 : vector<1x32xf32> to vector<16x32xf32>
    %25 = arith.mulf %22, %24 : vector<16x32xf32>
    %c0_9 = arith.constant 0 : index
    %c0_10 = arith.constant 0 : index
    %26 = vector.load %arg4[%c0_9, %c0_10] : memref<1x32xf32, #tpu.memory_space<vmem>>, vector<1x32xf32>
    %27 = vector.broadcast %26 : vector<1x32xf32> to vector<16x32xf32>
    %28 = arith.addf %25, %27 : vector<16x32xf32>
    %29 = arith.truncf %28 : vector<16x32xf32> to vector<16x32xbf16>
    %c0_11 = arith.constant 0 : index
    %c0_12 = arith.constant 0 : index
    %30 = vector.load %arg5[%c0_11, %c0_12] : memref<16x32xbf16, #tpu.memory_space<vmem>>, vector<16x32xbf16>
    tpu.vector_store %arg5[%c0_11, %c0_12], %29 {strides = array<i32>} : memref<16x32xbf16, #tpu.memory_space<vmem>>, vector<16x32xbf16>,
    return
  }
  func.func @transform_0(%arg0: i32) -> (i32, i32) {
    %c0_i32 = arith.constant 0 : i32
    %c0_i32_0 = arith.constant 0 : i32
    return %arg0, %c0_i32 : i32, i32
  }
  func.func @transform_1(%arg0: i32) -> (i32, i32) {
    %c0_i32 = arith.constant 0 : i32
    %c0_i32_0 = arith.constant 0 : i32
    return %arg0, %c0_i32 : i32, i32
  }
  func.func @transform_2(%arg0: i32) -> (i32, i32) {
    %c0_i32 = arith.constant 0 : i32
    %c0_i32_0 = arith.constant 0 : i32
    %c0_i32_1 = arith.constant 0 : i32
    return %c0_i32, %c0_i32_0 : i32, i32
  }
  func.func @transform_3(%arg0: i32) -> (i32, i32) {
    %c0_i32 = arith.constant 0 : i32
    %c0_i32_0 = arith.constant 0 : i32
    %c0_i32_1 = arith.constant 0 : i32
    return %c0_i32, %c0_i32_0 : i32, i32
  }
  func.func @transform_4(%arg0: i32) -> (i32, i32) {
    %c0_i32 = arith.constant 0 : i32
    %c0_i32_0 = arith.constant 0 : i32
    return %arg0, %c0_i32 : i32, i32
  }
}

</mosaic_0001>

<llo_original>
// kernel: tpu_custom_call.1
$region0: #{tpu_custom_call.1}
  #allocation0 [shape = 'u32[]', space=smem, size = 0x4, offset = 0x4, fixed_abs, tag = 'smem constant byte address 0x4 - core index']
  #allocation1 [shape = 'u32[144,128]{1,0:T(1,128)}', space=vmem, size = 0x12000, scoped, tag = 'internal scratch']
  %s0 = inlined_call_operand.hbm [shape: bf16[16,32], index: 0, kind: input, shape index: {}]
  %s1 = inlined_call_operand.hbm [shape: bf16[16,32], index: 1, kind: input, shape index: {}]
  %s2 = inlined_call_operand.vmem [shape: f32[1,32], index: 2, kind: input, shape index: {}]
  %s3 = inlined_call_operand.vmem [shape: f32[1,32], index: 3, kind: input, shape index: {}]
  %s4 = inlined_call_operand.hbm [shape: bf16[16,32], index: 4, kind: output, shape index: {}]
  %s5 = sld [smem:[#allocation0]]
  $region34: #{tpu_custom_call.1} parent=0
    _
  %s7 = ssub.s32 1, %s5
  %s8 = scalar_select 0, %s7, %s5
  $region1: #{tpu_custom_call.1} parent=0
    #allocation2 [shape = 'u8[4096]{0}', space=vmem, size = 0x1000, scoped, tag = 'input window, operand 0, single buffered']
    #allocation3 [shape = 's32[1]{0}', space=sflag, size = 0x4, scoped, tag = 'scoped memory for tpu_custom_call.1']
    #allocation4 [shape = 's32[1]{0}', space=sflag, size = 0x4, scoped, tag = 'scoped memory for tpu_custom_call.1']
    #allocation5 [shape = 'u8[4096]{0}', space=vmem, size = 0x1000, scoped, tag = 'input window, operand 1, single buffered']
    #allocation6 [shape = 's32[1]{0}', space=sflag, size = 0x4, scoped, tag = 'scoped memory for tpu_custom_call.1']
    #allocation7 [shape = 'u8[4096]{0}', space=vmem, size = 0x1000, scoped, tag = 'output window, operand 0, single buffered']
    %9 = vsyncpa [#allocation3], 0
    %10 = vsyncpa [#allocation6], 0
    %11 = vsyncpa [#allocation4], 0
    // Predicated region
    $region2: #{tpu_custom_call.1} parent=1 // pred_check
      _
    $region3: #{tpu_custom_call.1} parent=1 // pred_check_branch
      %13 = sbr.rel (0) target = $region5
    $region4: #{tpu_custom_call.1} parent=1 // pred_region
      %s15 = ssub.s32 128, 128
      %16 = vsyncadd [#allocation3], %s15
      %s17 = sshll.u32 [#allocation2], 4
      %s18 = int_to_ptr.vmem [resolvable:$true] %s17
      %23 = dma.hbm_to_vmem [thread:$0]  %s0, 128, %s18, [#allocation3], 64, 64, 4
    $region5: #{tpu_custom_call.1} parent=1 // pred_fallthru
      _
    // Predicated region
    $region6: #{tpu_custom_call.1} parent=1 // pred_check
      _
    $region7: #{tpu_custom_call.1} parent=1 // pred_check_branch
      %25 = sbr.rel (0) target = $region9
    $region8: #{tpu_custom_call.1} parent=1 // pred_region
      %s27 = ssub.s32 128, 128
      %28 = vsyncadd [#allocation6], %s27
      %s29 = sshll.u32 [#allocation5], 4
      %s30 = int_to_ptr.vmem [resolvable:$true] %s29
      %35 = dma.hbm_to_vmem [thread:$0]  %s1, 128, %s30, [#allocation6], 64, 64, 4
    $region9: #{tpu_custom_call.1} parent=1 // pred_fallthru
      _
    // Predicated region
    $region10: #{tpu_custom_call.1} parent=1 // pred_check
      _
    $region11: #{tpu_custom_call.1} parent=1 // pred_check_branch
      %37 = sbr.rel (0) target = $region13
    $region12: #{tpu_custom_call.1} parent=1 // pred_region
      _
    $region13: #{tpu_custom_call.1} parent=1 // pred_fallthru
      _
    // Predicated region
    $region14: #{tpu_custom_call.1} parent=1 // pred_check
      _
    $region15: #{tpu_custom_call.1} parent=1 // pred_check_branch
      %39 = sbr.rel (0) target = $region17
    $region16: #{tpu_custom_call.1} parent=1 // pred_region
      _
    $region17: #{tpu_custom_call.1} parent=1 // pred_fallthru
      _
    // Predicated region
    $region18: #{tpu_custom_call.1} parent=1 // pred_check
      _
    $region19: #{tpu_custom_call.1} parent=1 // pred_check_branch
      %41 = sbr.rel (0) target = $region21
    $region20: #{tpu_custom_call.1} parent=1 // pred_region
      %42 = dma.done [#allocation3], 128
    $region21: #{tpu_custom_call.1} parent=1 // pred_fallthru
      _
    // Predicated region
    $region22: #{tpu_custom_call.1} parent=1 // pred_check
      _
    $region23: #{tpu_custom_call.1} parent=1 // pred_check_branch
      %44 = sbr.rel (0) target = $region25
    $region24: #{tpu_custom_call.1} parent=1 // pred_region
      %45 = dma.done [#allocation6], 128
    $region25: #{tpu_custom_call.1} parent=1 // pred_fallthru
      _
    %v46 = vld [vmem:[#allocation2] sm:$0xf]
    %v47 = vld [vmem:[#allocation2 + $0x4] sm:$0xf]
    %v48 = vunpack.c.l.bf16 %v46
    %v49 = vunpack.c.l.bf16 %v47
    %v50 = vld [vmem:[#allocation5] sm:$0xf]
    %v51 = vld [vmem:[#allocation5 + $0x4] sm:$0xf]
    %v52 = vunpack.c.l.bf16 %v50
    %v53 = vunpack.c.l.bf16 %v51
    %v54 = vadd.f32 %v48, %v52
    %v55 = vadd.f32 %v49, %v53
    %vm56 = vcmask 261120
    %v57 = vsel %vm56, %v54, 0.0
    %58 = vadd.xlane.f32.xlu0 %v57
    %v59 = vpop.xlane.xlu0 %58
    %v60 = vsel %vm56, %v55, 0.0
    %61 = vadd.xlane.f32.xlu0 %v60
    %v62 = vpop.xlane.xlu0 %61
    %v63 = vrcp.pop 32.0
    %v64 = vmul.f32 %v59, %v63
    %v65 = vmul.f32 %v62, %v63
    %v66 = vsub.f32 %v54, %v64
    %v67 = vsub.f32 %v55, %v65
    %v68 = vmul.f32 %v66, %v66
    %v69 = vmul.f32 %v67, %v67
    %v70 = vsel %vm56, %v68, 0.0
    %71 = vadd.xlane.f32.xlu0 %v70
    %v72 = vpop.xlane.xlu0 %71
    %v73 = vsel %vm56, %v69, 0.0
    %74 = vadd.xlane.f32.xlu0 %v73
    %v75 = vpop.xlane.xlu0 %74
    %v76 = vmul.f32 %v72, %v63
    %v77 = vmul.f32 %v75, %v63
    %v78 = vadd.f32 %v76, 1e-05
    %v79 = vadd.f32 %v77, 1e-05
    %v80 = vrsqrt.pop %v78
    %v81 = vrsqrt.pop %v79
    %v82 = vmul.f32 %v66, %v80
    %v83 = vmul.f32 %v67, %v81
    %v84 = vld [vmem:[%s2] sm:$0x1]
    %v86 = vlaneseq
    %v87 = vshrl.u32 %v86, 7
    %v88 = vsub.s32 0, %v87
    %v89 = vrot.slane %v84, %v88
    %v91 = vmul.f32 %v82, %v89
    %v92 = vmul.f32 %v83, %v89
    %v93 = vld [vmem:[%s3] sm:$0x1]
    %v95 = vlaneseq
    %v96 = vshrl.u32 %v95, 7
    %v97 = vsub.s32 0, %v96
    %v98 = vrot.slane %v93, %v97
    %v100 = vadd.f32 %v91, %v98
    %v101 = vadd.f32 %v92, %v98
    %v102 = vpack.c.bf16 %v101, %v100
    %v104 = vunpack.c.l.b16 %v102
    %v105 = vunpack.c.h.b16 %v102
    %v106 = vpack.c.b16 %v104, %v104
    %v107 = vpack.c.b16 %v105, %v105
    %vm110 = vcmask 257024
    %111 = vst.msk [vmem:[#allocation7] sm:$0xf] %vm110, %v106
    %112 = vst.msk [vmem:[#allocation7 + $0x4] sm:$0xf] %vm110, %v107
    // Predicated region
    $region26: #{tpu_custom_call.1} parent=1 // pred_check
      _
    $region27: #{tpu_custom_call.1} parent=1 // pred_check_branch
      %114 = sbr.rel (0) target = $region29
    $region28: #{tpu_custom_call.1} parent=1 // pred_region
      %s116 = ssub.s32 128, 128
      %117 = vsyncadd [#allocation4], %s116
      %s118 = sshll.u32 [#allocation7], 4
      %s119 = int_to_ptr.vmem [resolvable:$true] %s118
      %124 = dma.vmem_to_hbm [thread:$0]  %s119, 128, %s4, [#allocation4], 64, 64, 4
    $region29: #{tpu_custom_call.1} parent=1 // pred_fallthru
      _
    // Predicated region
    $region30: #{tpu_custom_call.1} parent=1 // pred_check
      _
    $region31: #{tpu_custom_call.1} parent=1 // pred_check_branch
      %126 = sbr.rel (0) target = $region33
    $region32: #{tpu_custom_call.1} parent=1 // pred_region
      %127 = dma.done [#allocation4], 128
    $region33: #{tpu_custom_call.1} parent=1 // pred_fallthru
      _
    %128 = vsyncpa [#allocation3], 1
    %129 = vsyncpa [#allocation6], 1
    %130 = vsyncpa [#allocation4], 1

</llo_original>
